<compile_context>
chip_gen: v5e
topology: v5e:2x2
jax: 0.10.0
libtpu: 0.0.40
codegen_flags: <defaults>
</compile_context>

<pallas_src>
import functools

import jax
import jax.numpy as jnp
from jax.experimental import pallas as pl
from jax.experimental.pallas import tpu as pltpu

_MiB = 1024 * 1024


def _tpu_config():
    """(vmem_budget_bytes, vmem_limit_bytes, min_grid_steps) per TPU generation."""
    kind = ""
    try:
        dev = jax.devices()[0]
        if dev.platform == "tpu":
            kind = dev.device_kind.lower()
    except Exception:
        pass
    if "v7" in kind or "7x" in kind:
        return 20 * _MiB, 40 * _MiB, 2     # 64 MiB physical VMEM, 2 TCs / chip
    if "v6" in kind:
        return 48 * _MiB, 64 * _MiB, 1     # 128 MiB physical, 1 TC
    if "v5 lite" in kind or "v5e" in kind or "v5lite" in kind:
        return 48 * _MiB, 64 * _MiB, 1     # 128 MiB physical (scoped default only 16 MiB)
    if "v5" in kind or "v4" in kind:
        return 48 * _MiB, 64 * _MiB, 2     # v4/v5p: 2 TensorCores (megacore)
    return 12 * _MiB, 32 * _MiB, 1         # unknown backend / interpret: conservative


def _pick_blocks(B, Tq, Tk, D, Dv, q_isz, k_isz, v_isz, attn_isz, mask_isz,
                 vmem_budget_bytes, min_grid_steps=1):
    """Pick (batch_block, q_block) so the double-buffered working set fits the
    generation-specific VMEM budget; fail loudly if it cannot."""
    tq = min(Tq, 512)
    bb = min(B, 32)

    def step_bytes(bb_, tq_):
        # double-buffered HBM<->VMEM streams
        in_bytes = (tq_ * D * q_isz + Tk * D * k_isz + Tk * Dv * v_isz
                    + tq_ * Tk * mask_isz)
        out_bytes = tq_ * Dv * q_isz + tq_ * Tk * attn_isz
        # in-kernel intermediates: scaled-q copy, f32 scores/exp/attn,
        # attn cast for the PV matmul, f32 out before the final cast.
        interm = (tq_ * D * 4 + 3 * tq_ * Tk * 4
                  + tq_ * Tk * max(v_isz, attn_isz, 1) + tq_ * Dv * 4)
        return bb_ * (2 * (in_bytes + out_bytes) + interm)

    while bb > 1 and step_bytes(bb, tq) > vmem_budget_bytes:
        bb = max(1, bb // 2)
    while step_bytes(bb, tq) > vmem_budget_bytes:
        new_tq = max(8, ((tq // 2) // 8) * 8)   # keep tq a multiple of 8 when < Tq
        if new_tq == tq:
            break
        tq = new_tq
    if step_bytes(bb, tq) > vmem_budget_bytes:
        # TODO(synk): add a Tk (flash-style online-softmax) grid axis so very long
        # key sequences do not have to hold K/V/scores for the full Tk in VMEM.
        raise ValueError(
            f"SDPA tile (bb={bb}, tq={tq}, Tk={Tk}) needs ~{step_bytes(bb, tq)} B "
            f"of VMEM, over the {vmem_budget_bytes} B budget; Tk tiling not implemented.")

    # Give every TensorCore at least one grid step (v7x has 2 TCs per chip).
    if pl.cdiv(B, bb) * pl.cdiv(Tq, tq) < min_grid_steps:
        if B >= min_grid_steps:
            bb = pl.cdiv(B, min_grid_steps)
        elif Tq >= 8 * min_grid_steps:
            tq = min(tq, ((pl.cdiv(Tq, min_grid_steps) + 7) // 8) * 8)
    return bb, tq


def _attn_pack_factor(Tq, Tk, tq):
    """g query rows packed into the lane axis of the attn output so its last
    dim becomes g*Tk == 128 (unmasked, lane-dense vst instead of vst.msk)."""
    if Tk >= 128 or 128 % Tk != 0:
        return 1
    g = 128 // Tk
    if Tq % g != 0 or tq % g != 0:
        return 1
    if tq != Tq and (tq // g) % 8 != 0:
        return 1   # packed 2nd-minor dim must stay 8-aligned when tiling Tq
    return g


def _sdpa_kernel(*refs, inv_temper, has_mask, return_attn, pack_g, bf16_matmul):
    q_ref, k_ref, v_ref = refs[0], refs[1], refs[2]
    pos = 3
    mask_ref = None
    if has_mask:
        mask_ref = refs[pos]
        pos += 1
    out_ref = refs[pos]
    attn_ref = refs[pos + 1] if return_attn else None

    q = q_ref[...]
    k = k_ref[...]
    v = v_ref[...]

    # Fold 1/sqrt(d_model) into q (Tq*D mults) instead of the (Tq,Tk) scores.
    # NOTE: for bf16 inputs this rounds the scale in bf16 (within bf16 noise).
    qs = q * jnp.asarray(inv_temper, dtype=q.dtype)

    if bf16_matmul and qs.dtype == jnp.float32:
        qs_mm, k_mm = qs.astype(jnp.bfloat16), k.astype(jnp.bfloat16)
    else:
        qs_mm, k_mm = qs, k

    # scores = q @ k^T via batched contraction of the last axes — no explicit
    # transpose of K in front of the MXU; accumulate in f32.
    scores = jnp.einsum("bqd,bkd->bqk", qs_mm, k_mm,
                        preferred_element_type=jnp.float32)

    if mask_ref is not None:
        # masked_fill(attn_mask, -1e18): nonzero mask entries are masked out.
        # Fully-masked rows give a uniform distribution (same as PyTorch).
        scores = jnp.where(mask_ref[...] != 0, jnp.float32(-1e18), scores)

    # Softmax over the key axis, all post-MXU elementwise kept in f32 (v5e-safe).
    mx = jnp.max(scores, axis=-1, keepdims=True)
    ex = jnp.exp(scores - mx)
    denom = jnp.sum(ex, axis=-1, keepdims=True)
    # Exact per-row reciprocal: attn is a user-visible output, so no
    # pl.reciprocal(approx=True) here (its error broke reference parity).
    attn = ex * (jnp.float32(1.0) / denom)

    # TODO(synk): nn.Dropout(0.1) on attn treated as identity (eval mode);
    # training dropout would use pltpu.prng_seed / pltpu.prng_random_bits.

    if bf16_matmul and v.dtype == jnp.float32:
        pv_dtype = jnp.bfloat16
        v_mm = v.astype(pv_dtype)
    else:
        pv_dtype = v.dtype
        v_mm = v
    out = jnp.einsum("bqk,bkd->bqd", attn.astype(pv_dtype), v_mm,
                     preferred_element_type=jnp.float32)
    out_ref[...] = out.astype(out_ref.dtype)

    if attn_ref is not None:
        a = attn.astype(attn_ref.dtype)
        if pack_g > 1:
            bb_, tq_, tk_ = a.shape
            a = a.reshape(bb_, tq_ // pack_g, pack_g * tk_)  # lane-dense store
        attn_ref[...] = a


def scaled_dot_product_attention(q, k, v, attn_mask=None, d_model=None,
                                 return_attn=True, use_bf16_matmul=False):
    """q:[B,Tq,D] k:[B,Tk,D] v:[B,Tk,Dv] attn_mask:[B,Tq,Tk] (bool / 0-1).

    Returns (output, attn) like the PyTorch module; with return_attn=False it
    returns only output and skips the B*Tq*Tk attn HBM writeback entirely.
    """
    B, Tq, D = q.shape
    Bk, Tk, Dk = k.shape
    Bv, Tkv, Dv = v.shape
    assert B == Bk == Bv and D == Dk and Tk == Tkv
    if d_model is None:
        d_model = D
    inv_temper = 1.0 / (float(d_model) ** 0.5)

    out_dtype = q.dtype
    attn_dtype = q.dtype  # bf16 inputs -> bf16 attn writeback (halves that stream)

    has_mask = attn_mask is not None
    if has_mask:
        assert attn_mask.shape == (B, Tq, Tk), (
            f"Attention mask shape {attn_mask.shape} mismatch with logits {(B, Tq, Tk)}")
        mask = (attn_mask != 0).astype(jnp.int8)   # 1 byte/elem; nonzero == masked
        mask_isz = 1
    else:
        mask = None
        mask_isz = 0

    vmem_budget, vmem_limit, n_cores = _tpu_config()
    attn_isz = jnp.dtype(attn_dtype).itemsize if return_attn else 0
    bb, tq = _pick_blocks(B, Tq, Tk, D, Dv,
                          q.dtype.itemsize, k.dtype.itemsize, v.dtype.itemsize,
                          attn_isz, mask_isz,
                          vmem_budget_bytes=vmem_budget,
                          min_grid_steps=n_cores)

    g = _attn_pack_factor(Tq, Tk, tq) if return_attn else 1
    grid = (pl.cdiv(B, bb), pl.cdiv(Tq, tq))

    in_specs = [
        pl.BlockSpec((bb, tq, D), lambda b, i: (b, i, 0)),
        pl.BlockSpec((bb, Tk, D), lambda b, i: (b, 0, 0)),
        pl.BlockSpec((bb, Tk, Dv), lambda b, i: (b, 0, 0)),
    ]
    # TODO(synk): K/V blocks are constant over the inner Tq axis; a single-buffered
    # pipeline_mode would halve their VMEM footprint once re-DMA elision is confirmed.
    inputs = [q, k, v]
    if has_mask:
        in_specs.append(pl.BlockSpec((bb, tq, Tk), lambda b, i: (b, i, 0)))
        inputs.append(mask)

    out_spec_o = pl.BlockSpec((bb, tq, Dv), lambda b, i: (b, i, 0))
    if return_attn:
        out_shape = (jax.ShapeDtypeStruct((B, Tq, Dv), out_dtype),
                     jax.ShapeDtypeStruct((B, Tq // g, g * Tk), attn_dtype))
        out_specs = (out_spec_o,
                     pl.BlockSpec((bb, tq // g, g * Tk), lambda b, i: (b, i, 0)))
    else:
        out_shape = jax.ShapeDtypeStruct((B, Tq, Dv), out_dtype)
        out_specs = out_spec_o

    kernel = functools.partial(
        _sdpa_kernel, inv_temper=inv_temper, has_mask=has_mask,
        return_attn=return_attn, pack_g=g, bf16_matmul=use_bf16_matmul)

    flops = 2 * B * Tq * Tk * D + 2 * B * Tq * Tk * Dv
    bytes_accessed = (q.size * q.dtype.itemsize
                      + k.size * k.dtype.itemsize
                      + v.size * v.dtype.itemsize
                      + (mask.size if has_mask else 0)
                      + B * Tq * Dv * jnp.dtype(out_dtype).itemsize
                      + (B * Tq * Tk * attn_isz if return_attn else 0))
    cost = pl.CostEstimate(flops=flops, transcendentals=B * Tq * Tk,
                           bytes_accessed=bytes_accessed)

    result = pl.pallas_call(
        kernel,
        out_shape=out_shape,
        grid=grid,
        in_specs=in_specs,
        out_specs=out_specs,
        compiler_params=pltpu.CompilerParams(
            dimension_semantics=("parallel", "parallel"),
            vmem_limit_bytes=vmem_limit),
        cost_estimate=cost,
    )(*inputs)

    if not return_attn:
        return result
    out, attn_packed = result
    attn = attn_packed.reshape(B, Tq, Tk) if g > 1 else attn_packed
    return out, attn


def _reference(q, k, v, attn_mask, d_model):
    temper = float(d_model) ** 0.5
    scores = jnp.einsum("bqd,bkd->bqk", q, k,
                        precision=jax.lax.Precision.HIGHEST).astype(jnp.float32) / temper
    if attn_mask is not None:
        scores = jnp.where(attn_mask.astype(bool), -1e18, scores)
    attn = jax.nn.softmax(scores, axis=-1)
    out = jnp.einsum("bqk,bkd->bqd", attn, v.astype(jnp.float32),
                     precision=jax.lax.Precision.HIGHEST)
    return out, attn


if __name__ == "__main__":
    # --- shape 1: module-scale smoke test (batch=2, seq=8, d_model=32) ----------
    B, Tq, Tk, D = 2, 8, 8, 32
    kq, kk, kv, km = jax.random.split(jax.random.PRNGKey(0), 4)
    q = jax.random.normal(kq, (B, Tq, D), dtype=jnp.float32)
    k = jax.random.normal(kk, (B, Tk, D), dtype=jnp.float32)
    v = jax.random.normal(kv, (B, Tk, D), dtype=jnp.float32)
    mask = (jax.random.uniform(km, (B, Tq, Tk)) > 0.8).astype(jnp.float32)

    out, attn = scaled_dot_product_attention(q, k, v, attn_mask=mask, d_model=D)
    out_nm, attn_nm = scaled_dot_product_attention(q, k, v, attn_mask=None, d_model=D)
    jax.block_until_ready((out, attn, out_nm, attn_nm))

    ref_out, ref_attn = _reference(q, k, v, mask, D)
    ref_out_nm, ref_attn_nm = _reference(q, k, v, None, D)
    # Tolerances cover TPU f32-matmul default precision; math itself is exact.
    assert jnp.allclose(out, ref_out, atol=5e-3, rtol=5e-3)
    assert jnp.allclose(attn, ref_attn, atol=5e-3, rtol=5e-3)
    assert jnp.allclose(out_nm, ref_out_nm, atol=5e-3, rtol=5e-3)
    assert jnp.allclose(attn_nm, ref_attn_nm, atol=5e-3, rtol=5e-3)

    # --- shape 2: exercises the lane-packed attn writeback (Tk=16 -> g=8), ------
    # --- the no-attn-return variant and the bf16-MXU flag. ----------------------
    B2, Tq2, Tk2, D2 = 2, 32, 16, 64
    kq2, kk2, kv2, km2 = jax.random.split(jax.random.PRNGKey(1), 4)
    q2 = jax.random.normal(kq2, (B2, Tq2, D2), dtype=jnp.float32)
    k2 = jax.random.normal(kk2, (B2, Tk2, D2), dtype=jnp.float32)
    v2 = jax.random.normal(kv2, (B2, Tk2, D2), dtype=jnp.float32)
    mask2 = (jax.random.uniform(km2, (B2, Tq2, Tk2)) > 0.8).astype(jnp.float32)

    out2, attn2 = scaled_dot_product_attention(q2, k2, v2, attn_mask=mask2, d_model=D2)
    out2_only = scaled_dot_product_attention(q2, k2, v2, attn_mask=mask2, d_model=D2,
                                             return_attn=False)
    out2_bf16, _ = scaled_dot_product_attention(q2, k2, v2, attn_mask=mask2, d_model=D2,
                                                use_bf16_matmul=True)
    jax.block_until_ready((out2, attn2, out2_only, out2_bf16))

    ref_out2, ref_attn2 = _reference(q2, k2, v2, mask2, D2)
    assert jnp.allclose(out2, ref_out2, atol=5e-3, rtol=5e-3)
    assert jnp.allclose(attn2, ref_attn2, atol=5e-3, rtol=5e-3)
    assert jnp.allclose(out2_only, ref_out2, atol=5e-3, rtol=5e-3)
    assert jnp.allclose(out2_bf16, ref_out2, atol=3e-2, rtol=3e-2)  # bf16-MXU path

    print("KERNEL_OK")
</pallas_src>

<mosaic_0001>
module attributes {stable_mosaic.version = 11 : i64} {
  func.func @_sdpa_kernel(%arg0: i32, %arg1: i32, %arg2: memref<2x8x32xf32, #tpu.memory_space<vmem>>, %arg3: memref<2x8x32xf32, #tpu.memory_space<vmem>>, %arg4: memref<2x8x32xf32, #tpu.memory_space<vmem>>, %arg5: memref<2x8x8xi8, #tpu.memory_space<vmem>>, %arg6: memref<2x8x32xf32, #tpu.memory_space<vmem>>, %arg7: memref<2x8x8xf32, #tpu.memory_space<vmem>>) attributes {dimension_semantics = [#tpu.dimension_semantics<parallel>, #tpu.dimension_semantics<parallel>], iteration_bounds = array<i64: 1, 1>, scalar_prefetch = 0 : i64, scratch_operands = 0 : i64, tpu.core_type = #tpu.core_type<tc>, window_params = [{transform_indices = @transform_0, window_bounds = array<i64: 2, 8, 32>}, {transform_indices = @transform_1, window_bounds = array<i64: 2, 8, 32>}, {transform_indices = @transform_2, window_bounds = array<i64: 2, 8, 32>}, {transform_indices = @transform_3, window_bounds = array<i64: 2, 8, 8>}, {transform_indices = @transform_4, window_bounds = array<i64: 2, 8, 32>}, {transform_indices = @transform_5, window_bounds = array<i64: 2, 8, 8>}]} {
    %c0 = arith.constant 0 : index
    %c0_0 = arith.constant 0 : index
    %c0_1 = arith.constant 0 : index
    %0 = vector.load %arg2[%c0, %c0_0, %c0_1] : memref<2x8x32xf32, #tpu.memory_space<vmem>>, vector<2x8x32xf32>
    %c0_2 = arith.constant 0 : index
    %c0_3 = arith.constant 0 : index
    %c0_4 = arith.constant 0 : index
    %1 = vector.load %arg3[%c0_2, %c0_3, %c0_4] : memref<2x8x32xf32, #tpu.memory_space<vmem>>, vector<2x8x32xf32>
    %c0_5 = arith.constant 0 : index
    %c0_6 = arith.constant 0 : index
    %c0_7 = arith.constant 0 : index
    %2 = vector.load %arg4[%c0_5, %c0_6, %c0_7] : memref<2x8x32xf32, #tpu.memory_space<vmem>>, vector<2x8x32xf32>
    %cst = arith.constant 0.176776692 : f32
    %3 = vector.broadcast %cst : f32 to vector<2x8x32xf32>
    %4 = arith.mulf %0, %3 : vector<2x8x32xf32>
    "tpu.trace_start"() <{level = 10 : i32, message = "bqd,bkd->bqk"}> : () -> ()
    %cst_8 = arith.constant dense<0.000000e+00> : vector<2x8x8xf32>
    %5 = tpu.matmul %4, %1, %cst_8 {dimension_numbers = #tpu.dot_dimension_numbers<[2], [2], [1], [1], [0, 0, 0, 1, 1, 1], [0], [0]>} : vector<2x8x32xf32>, vector<2x8x32xf32>, vector<2x8x8xf32> -> vector<2x8x8xf32>
    "tpu.trace_stop"() : () -> ()
    %c0_9 = arith.constant 0 : index
    %c0_10 = arith.constant 0 : index
    %c0_11 = arith.constant 0 : index
    %6 = vector.load %arg5[%c0_9, %c0_10, %c0_11] : memref<2x8x8xi8, #tpu.memory_space<vmem>>, vector<2x8x8xi8>
    %c0_i8 = arith.constant 0 : i8
    %7 = vector.broadcast %c0_i8 : i8 to vector<2x8x8xi8>
    %8 = arith.cmpi ne, %6, %7 : vector<2x8x8xi8>
    %cst_12 = arith.constant -9.99999984E+17 : f32
    %9 = vector.broadcast %cst_12 : f32 to vector<2x8x8xf32>
    %10 = arith.select %8, %9, %5 : vector<2x8x8xi1>, vector<2x8x8xf32>
    %cst_13 = arith.constant dense<0xFF800000> : vector<2x8xf32>
    %11 = vector.multi_reduction <maximumf>, %10, %cst_13 [2] : vector<2x8x8xf32> to vector<2x8xf32>
    %12 = vector.shape_cast %11 : vector<2x8xf32> to vector<2x8x1xf32>
    %13 = vector.broadcast %12 : vector<2x8x1xf32> to vector<2x8x8xf32>
    %14 = arith.subf %10, %13 : vector<2x8x8xf32>
    %15 = math.exp %14 : vector<2x8x8xf32>
    %cst_14 = arith.constant dense<0.000000e+00> : vector<2x8xf32>
    %16 = vector.multi_reduction <add>, %15, %cst_14 [2] : vector<2x8x8xf32> to vector<2x8xf32>
    %17 = vector.shape_cast %16 : vector<2x8xf32> to vector<2x8x1xf32>
    %cst_15 = arith.constant 1.000000e+00 : f32
    %18 = vector.broadcast %cst_15 : f32 to vector<2x8x1xf32>
    %19 = arith.divf %18, %17 : vector<2x8x1xf32>
    %20 = vector.broadcast %19 : vector<2x8x1xf32> to vector<2x8x8xf32>
    %21 = arith.mulf %15, %20 : vector<2x8x8xf32>
    "tpu.trace_start"() <{level = 10 : i32, message = "bqk,bkd->bqd"}> : () -> ()
    %cst_16 = arith.constant dense<0.000000e+00> : vector<2x8x32xf32>
    %22 = tpu.matmul %21, %2, %cst_16 {dimension_numbers = #tpu.dot_dimension_numbers<[2], [1], [1], [2], [0, 0, 0, 1, 1, 2], [0], [0]>} : vector<2x8x8xf32>, vector<2x8x32xf32>, vector<2x8x32xf32> -> vector<2x8x32xf32>
    "tpu.trace_stop"() : () -> ()
    %c0_17 = arith.constant 0 : index
    %c0_18 = arith.constant 0 : index
    %c0_19 = arith.constant 0 : index
    %23 = vector.load %arg6[%c0_17, %c0_18, %c0_19] : memref<2x8x32xf32, #tpu.memory_space<vmem>>, vector<2x8x32xf32>
    tpu.vector_store %arg6[%c0_17, %c0_18, %c0_19], %22 {strides = array<i32>} : memref<2x8x32xf32, #tpu.memory_space<vmem>>, vector<2x8x32xf32>,
    %c0_20 = arith.constant 0 : index
    %c0_21 = arith.constant 0 : index
    %c0_22 = arith.constant 0 : index
    %24 = vector.load %arg7[%c0_20, %c0_21, %c0_22] : memref<2x8x8xf32, #tpu.memory_space<vmem>>, vector<2x8x8xf32>
    tpu.vector_store %arg7[%c0_20, %c0_21, %c0_22], %21 {strides = array<i32>} : memref<2x8x8xf32, #tpu.memory_space<vmem>>, vector<2x8x8xf32>,
    return
  }
  func.func @transform_0(%arg0: i32, %arg1: i32) -> (i32, i32, i32) {
    %c0_i32 = arith.constant 0 : i32
    %c0_i32_0 = arith.constant 0 : i32
    return %arg0, %arg1, %c0_i32 : i32, i32, i32
  }
  func.func @transform_1(%arg0: i32, %arg1: i32) -> (i32, i32, i32) {
    %c0_i32 = arith.constant 0 : i32
    %c0_i32_0 = arith.constant 0 : i32
    %c0_i32_1 = arith.constant 0 : i32
    return %arg0, %c0_i32, %c0_i32_0 : i32, i32, i32
  }
  func.func @transform_2(%arg0: i32, %arg1: i32) -> (i32, i32, i32) {
    %c0_i32 = arith.constant 0 : i32
    %c0_i32_0 = arith.constant 0 : i32
    %c0_i32_1 = arith.constant 0 : i32
    return %arg0, %c0_i32, %c0_i32_0 : i32, i32, i32
  }
  func.func @transform_3(%arg0: i32, %arg1: i32) -> (i32, i32, i32) {
    %c0_i32 = arith.constant 0 : i32
    %c0_i32_0 = arith.constant 0 : i32
    return %arg0, %arg1, %c0_i32 : i32, i32, i32
  }
  func.func @transform_4(%arg0: i32, %arg1: i32) -> (i32, i32, i32) {
    %c0_i32 = arith.constant 0 : i32
    %c0_i32_0 = arith.constant 0 : i32
    return %arg0, %arg1, %c0_i32 : i32, i32, i32
  }
  func.func @transform_5(%arg0: i32, %arg1: i32) -> (i32, i32, i32) {
    %c0_i32 = arith.constant 0 : i32
    %c0_i32_0 = arith.constant 0 : i32
    return %arg0, %arg1, %c0_i32 : i32, i32, i32
  }
}

</mosaic_0001>

<llo_original>
// kernel: tpu_custom_call.1
$region0: #{tpu_custom_call.1}
  #allocation0 [shape = 'u32[]', space=smem, size = 0x4, offset = 0x4, fixed_abs, tag = 'smem constant byte address 0x4 - core index']
  #allocation1 [shape = 'u32[72,128]{1,0:T(1,128)}', space=vmem, size = 0x9000, scoped, tag = 'internal scratch']
  %s0 = inlined_call_operand.hbm [shape: f32[2,8,32], index: 0, kind: input, shape index: {}]
  %s1 = inlined_call_operand.hbm [shape: f32[2,8,32], index: 1, kind: input, shape index: {}]
  %s2 = inlined_call_operand.hbm [shape: f32[2,8,32], index: 2, kind: input, shape index: {}]
  %s3 = inlined_call_operand.hbm [shape: s8[2,8,8], index: 3, kind: input, shape index: {}]
  %s4 = inlined_call_operand.hbm [shape: f32[2,8,32], index: 4, kind: output, shape index: {0}]
  %s5 = inlined_call_operand.hbm [shape: f32[2,8,8], index: 5, kind: output, shape index: {1}]
  %6 = xla_tuple %s4, %s5
  %s7 = sld [smem:[#allocation0]]
  $region50: #{tpu_custom_call.1} parent=0
    _
  %s9 = ssub.s32 1, %s7
  %s10 = scalar_select 0, %s9, %s7
  $region1: #{tpu_custom_call.1} parent=0
    #allocation2 [shape = 'u8[8192]{0}', space=vmem, size = 0x2000, scoped, tag = 'input window, operand 0, single buffered']
    #allocation3 [shape = 's32[1]{0}', space=sflag, size = 0x4, scoped, tag = 'scoped memory for tpu_custom_call.1']
    #allocation4 [shape = 's32[1]{0}', space=sflag, size = 0x4, scoped, tag = 'scoped memory for tpu_custom_call.1']
    #allocation5 [shape = 'u8[8192]{0}', space=vmem, size = 0x2000, scoped, tag = 'input window, operand 1, single buffered']
    #allocation6 [shape = 's32[1]{0}', space=sflag, size = 0x4, scoped, tag = 'scoped memory for tpu_custom_call.1']
    #allocation7 [shape = 'u8[8192]{0}', space=vmem, size = 0x2000, scoped, tag = 'input window, operand 2, single buffered']
    #allocation8 [shape = 'u8[2048]{0}', space=vmem, size = 0x800, scoped, tag = 'input window, operand 3, single buffered']
    #allocation9 [shape = 's32[1]{0}', space=sflag, size = 0x4, scoped, tag = 'scoped memory for tpu_custom_call.1']
    #allocation10 [shape = 'u8[8192]{0}', space=vmem, size = 0x2000, scoped, tag = 'output window, operand 0, single buffered']
    #allocation11 [shape = 'u8[8192]{0}', space=vmem, size = 0x2000, scoped, tag = 'output window, operand 1, single buffered']
    #allocation12 [shape = 's32[1]{0}', space=sflag, size = 0x4, scoped, tag = 'scoped memory for tpu_custom_call.1']
    %11 = vsyncpa [#allocation3], 0
    %12 = vsyncpa [#allocation6], 0
    %13 = vsyncpa [#allocation9], 0
    %14 = vsyncpa [#allocation4], 0
    %15 = vsyncpa [#allocation12], 0
    // Predicated region
    $region2: #{tpu_custom_call.1} parent=1 // pred_check
      _
    $region3: #{tpu_custom_call.1} parent=1 // pred_check_branch
      %17 = sbr.rel (0) target = $region5
    $region4: #{tpu_custom_call.1} parent=1 // pred_region
      %19 = vsyncadd [#allocation3], 0
      %s20 = sshll.u32 %s0, 4
      %s21 = int_to_ptr.hbm [resolvable:$true] %s20
      %s22 = sshll.u32 [#allocation2], 4
      %s23 = int_to_ptr.vmem [resolvable:$true] %s22
      %28 = dma.hbm_to_vmem [thread:$0]  %s21, 256, %s23, [#allocation3], 128, 128, 8
    $region5: #{tpu_custom_call.1} parent=1 // pred_fallthru
      _
    // Predicated region
    $region6: #{tpu_custom_call.1} parent=1 // pred_check
      _
    $region7: #{tpu_custom_call.1} parent=1 // pred_check_branch
      %30 = sbr.rel (0) target = $region9
    $region8: #{tpu_custom_call.1} parent=1 // pred_region
      %32 = vsyncadd [#allocation6], 0
      %s33 = sshll.u32 %s1, 4
      %s34 = int_to_ptr.hbm [resolvable:$true] %s33
      %s35 = sshll.u32 [#allocation5], 4
      %s36 = int_to_ptr.vmem [resolvable:$true] %s35
      %41 = dma.hbm_to_vmem [thread:$0]  %s34, 256, %s36, [#allocation6], 128, 128, 8
    $region9: #{tpu_custom_call.1} parent=1 // pred_fallthru
      _
    // Predicated region
    $region10: #{tpu_custom_call.1} parent=1 // pred_check
      _
    $region11: #{tpu_custom_call.1} parent=1 // pred_check_branch
      %43 = sbr.rel (0) target = $region13
    $region12: #{tpu_custom_call.1} parent=1 // pred_region
      %45 = vsyncadd [#allocation6], 0
      %s46 = sshll.u32 %s2, 4
      %s47 = int_to_ptr.hbm [resolvable:$true] %s46
      %s48 = sshll.u32 [#allocation7], 4
      %s49 = int_to_ptr.vmem [resolvable:$true] %s48
      %54 = dma.hbm_to_vmem [thread:$0]  %s47, 256, %s49, [#allocation6], 128, 128, 8
    $region13: #{tpu_custom_call.1} parent=1 // pred_fallthru
      _
    // Predicated region
    $region14: #{tpu_custom_call.1} parent=1 // pred_check
      _
    $region15: #{tpu_custom_call.1} parent=1 // pred_check_branch
      %56 = sbr.rel (0) target = $region17
    $region16: #{tpu_custom_call.1} parent=1 // pred_region
      %58 = vsyncadd [#allocation9], 0
      %s59 = sshll.u32 %s3, 4
      %s60 = int_to_ptr.hbm [resolvable:$true] %s59
      %s61 = sshll.u32 [#allocation8], 4
      %s62 = int_to_ptr.vmem [resolvable:$true] %s61
      %67 = dma.hbm_to_vmem [thread:$0]  %s60, 64, %s62, [#allocation9], 32, 32, 2
    $region17: #{tpu_custom_call.1} parent=1 // pred_fallthru
      _
    // Predicated region
    $region18: #{tpu_custom_call.1} parent=1 // pred_check
      _
    $region19: #{tpu_custom_call.1} parent=1 // pred_check_branch
      %69 = sbr.rel (0) target = $region21
    $region20: #{tpu_custom_call.1} parent=1 // pred_region
      %71 = dma.done [#allocation3], 256
    $region21: #{tpu_custom_call.1} parent=1 // pred_fallthru
      _
    // Predicated region
    $region22: #{tpu_custom_call.1} parent=1 // pred_check
      _
    $region23: #{tpu_custom_call.1} parent=1 // pred_check_branch
      %73 = sbr.rel (0) target = $region25
    $region24: #{tpu_custom_call.1} parent=1 // pred_region
      %75 = dma.done [#allocation6], 256
    $region25: #{tpu_custom_call.1} parent=1 // pred_fallthru
      _
    // Predicated region
    $region26: #{tpu_custom_call.1} parent=1 // pred_check
      _
    $region27: #{tpu_custom_call.1} parent=1 // pred_check_branch
      %77 = sbr.rel (0) target = $region29
    $region28: #{tpu_custom_call.1} parent=1 // pred_region
      %79 = dma.done [#allocation6], 256
    $region29: #{tpu_custom_call.1} parent=1 // pred_fallthru
      _
    // Predicated region
    $region30: #{tpu_custom_call.1} parent=1 // pred_check
      _
    $region31: #{tpu_custom_call.1} parent=1 // pred_check_branch
      %81 = sbr.rel (0) target = $region33
    $region32: #{tpu_custom_call.1} parent=1 // pred_region
      %83 = dma.done [#allocation9], 64
    $region33: #{tpu_custom_call.1} parent=1 // pred_fallthru
      _
    %v86 = vld [vmem:[#allocation2] sm:$0xff]
    %v87 = vld [vmem:[#allocation2 + $0x8] sm:$0xff]
    %v88 = vld [vmem:[#allocation5] sm:$0xff]
    %v89 = vld [vmem:[#allocation5 + $0x8] sm:$0xff]
    %v90 = vld [vmem:[#allocation7] sm:$0xff]
    %v91 = vld [vmem:[#allocation7 + $0x8] sm:$0xff]
    %v92 = vmul.f32 %v86, 0.17677669
    %v93 = vmul.f32 %v87, 0.17677669
    %vm94 = vcmask 261120
    %v96 = vsel %vm94, %v92, 0
    %v99 = vsel %vm94, %v88, 0
    %101 = vmatpush.xpose.msra.mxu0 0.0
    %102 = vmatpush.xpose.msra.mxu0 0.0
    %103 = vmatpush.xpose.msra.mxu0 0.0
    %104 = vmatpush.xpose.msra.mxu0 0.0
    %105 = vmatpush.xpose.msra.mxu0 0.0
    %106 = vmatpush.xpose.msra.mxu0 0.0
    %107 = vmatpush.xpose.msra.mxu0 0.0
    %108 = vmatpush.xpose.msra.mxu0 0.0
    %109 = vmatpush.xpose.msra.mxu0 0.0
    %110 = vmatpush.xpose.msra.mxu0 0.0
    %111 = vmatpush.xpose.msra.mxu0 0.0
    %112 = vmatpush.xpose.msra.mxu0 0.0
    %113 = vmatpush.xpose.msra.mxu0 0.0
    %114 = vmatpush.xpose.msra.mxu0 0.0
    %115 = vmatpush.xpose.msra.mxu0 0.0
    %116 = vmatpush.xpose.msra.mxu0 %v99
    %117 = vmatmul.f32.gmra.mxu0 %v96
    %v118 = vpop.f32.mrf.mxu0
    %v119 = vadd.f32 0.0, %v118
    %120 = vdwg.mxu0
    %v122 = vsel %vm94, %v93, 0
    %v125 = vsel %vm94, %v89, 0
    %127 = vmatpush.xpose.msra.mxu0 0.0
    %128 = vmatpush.xpose.msra.mxu0 0.0
    %129 = vmatpush.xpose.msra.mxu0 0.0
    %130 = vmatpush.xpose.msra.mxu0 0.0
    %131 = vmatpush.xpose.msra.mxu0 0.0
    %132 = vmatpush.xpose.msra.mxu0 0.0
    %133 = vmatpush.xpose.msra.mxu0 0.0
    %134 = vmatpush.xpose.msra.mxu0 0.0
    %135 = vmatpush.xpose.msra.mxu0 0.0
    %136 = vmatpush.xpose.msra.mxu0 0.0
    %137 = vmatpush.xpose.msra.mxu0 0.0
    %138 = vmatpush.xpose.msra.mxu0 0.0
    %139 = vmatpush.xpose.msra.mxu0 0.0
    %140 = vmatpush.xpose.msra.mxu0 0.0
    %141 = vmatpush.xpose.msra.mxu0 0.0
    %142 = vmatpush.xpose.msra.mxu0 %v125
    %143 = vmatmul.f32.gmra.mxu0 %v122
    %v144 = vpop.f32.mrf.mxu0
    %v145 = vadd.f32 0.0, %v144
    %146 = vdwg.mxu0
    %v147 = vld [vmem:[#allocation8] sm:$0x3]
    %v148 = vld [vmem:[#allocation8 + $0x2] sm:$0x3]
    %vm149 = vnez %v147
    %vm150 = vnez %v148
    %v151 = vsel %vm149, 16843009, 0
    %v152 = vsel %vm150, 16843009, 0
    %v153 = vunpack.c.0.s8 %v151
    %v154 = vunpack.c.0.s8 %v152
    %vm155 = vcmp.ne.s32.totalorder %v153, 0
    %vm156 = vcmp.ne.s32.totalorder %v154, 0
    %v157 = vsel %vm155, -1e+18, %v119
    %v158 = vsel %vm156, -1e+18, %v145
    %vm159 = vcmask 64512
    %v160 = vsel %vm159, %v157, -inf
    %161 = vmax.xlane.f32.xlu0 %v160
    %v162 = vpop.xlane.xlu0 %161
    %v163 = vsel %vm159, %v158, -inf
    %164 = vmax.xlane.f32.xlu0 %v163
    %v165 = vpop.xlane.xlu0 %164
    %v166 = vsub.f32 %v157, %v162
    %v167 = vsub.f32 %v158, %v165
    %v168 = vmul.f32 %v166, 1.442695
    %v169 = vpow.pop %v168
    %v170 = vmul.f32 %v167, 1.442695
    %v171 = vpow.pop %v170
    %v172 = vsel %vm159, %v169, 0.0
    %173 = vadd.xlane.f32.xlu0 %v172
    %v174 = vpop.xlane.xlu0 %173
    %v175 = vsel %vm159, %v171, 0.0
    %176 = vadd.xlane.f32.xlu0 %v175
    %v177 = vpop.xlane.xlu0 %176
    %v178 = vrcp.pop %v174
    %v179 = vmul.f32 %v174, %v178
    %v180 = vsub.f32 1.0, %v179
    %v181 = vmul.f32 %v178, %v180
    %v182 = vadd.f32 %v178, %v181
    %vm183 = vweird.f32 %v174
    %vm184 = vweird.f32 %v178
    %vm185 = vmor %vm183, %vm184
    %v186 = vsel %vm185, %v178, %v182
    %v187 = vand.u32 2147483647, %v174
    %vm188 = vcmp.eq.f32.partialorder %v187, 8.507059e+37
    %v189 = vand.u32 %v174, 2147483648
    %v190 = vor.u32 1.1754944e-38, %v189
    %v191 = vsel %vm188, %v190, %v186
    %v192 = vmul.f32 1.0, %v191
    %v193 = vrcp.pop %v177
    %v194 = vmul.f32 %v177, %v193
    %v195 = vsub.f32 1.0, %v194
    %v196 = vmul.f32 %v193, %v195
    %v197 = vadd.f32 %v193, %v196
    %vm198 = vweird.f32 %v177
    %vm199 = vweird.f32 %v193
    %vm200 = vmor %vm198, %vm199
    %v201 = vsel %vm200, %v193, %v197
    %v202 = vand.u32 2147483647, %v177
    %vm203 = vcmp.eq.f32.partialorder %v202, 8.507059e+37
    %v204 = vand.u32 %v177, 2147483648
    %v205 = vor.u32 1.1754944e-38, %v204
    %v206 = vsel %vm203, %v205, %v201
    %v207 = vmul.f32 1.0, %v206
    %v208 = vmul.f32 %v169, %v192
    %v209 = vmul.f32 %v171, %v207
    %v211 = vsel %vm159, %v208, 0
    %213 = vmatpush.msra.mxu0 0.0
    %214 = vmatpush.msra.mxu0 0.0
    %215 = vmatpush.msra.mxu0 0.0
    %216 = vmatpush.msra.mxu0 0.0
    %217 = vmatpush.msra.mxu0 0.0
    %218 = vmatpush.msra.mxu0 0.0
    %219 = vmatpush.msra.mxu0 0.0
    %220 = vmatpush.msra.mxu0 0.0
    %221 = vmatpush.msra.mxu0 0.0
    %222 = vmatpush.msra.mxu0 0.0
    %223 = vmatpush.msra.mxu0 0.0
    %224 = vmatpush.msra.mxu0 0.0
    %225 = vmatpush.msra.mxu0 0.0
    %226 = vmatpush.msra.mxu0 0.0
    %227 = vmatpush.msra.mxu0 0.0
    %228 = vmatpush.msra.mxu0 %v90
    %229 = vmatmul.f32.gmra.mxu0 %v211
    %v230 = vpop.f32.mrf.mxu0
    %v231 = vadd.f32 0.0, %v230
    %232 = vdwg.mxu0
    %v234 = vsel %vm159, %v209, 0
    %236 = vmatpush.msra.mxu0 0.0
    %237 = vmatpush.msra.mxu0 0.0
    %238 = vmatpush.msra.mxu0 0.0
    %239 = vmatpush.msra.mxu0 0.0
    %240 = vmatpush.msra.mxu0 0.0
    %241 = vmatpush.msra.mxu0 0.0
    %242 = vmatpush.msra.mxu0 0.0
    %243 = vmatpush.msra.mxu0 0.0
    %244 = vmatpush.msra.mxu0 0.0
    %245 = vmatpush.msra.mxu0 0.0
    %246 = vmatpush.msra.mxu0 0.0
    %247 = vmatpush.msra.mxu0 0.0
    %248 = vmatpush.msra.mxu0 0.0
    %249 = vmatpush.msra.mxu0 0.0
    %250 = vmatpush.msra.mxu0 0.0
    %251 = vmatpush.msra.mxu0 %v91
    %252 = vmatmul.f32.gmra.mxu0 %v234
    %v253 = vpop.f32.mrf.mxu0
    %v254 = vadd.f32 0.0, %v253
    %255 = vdwg.mxu0
    %256 = vst.msk [vmem:[#allocation10] sm:$0xff] %vm94, %v231
    %257 = vst.msk [vmem:[#allocation10 + $0x8] sm:$0xff] %vm94, %v254
    %258 = vst.msk [vmem:[#allocation11] sm:$0xff] %vm159, %v208
    %259 = vst.msk [vmem:[#allocation11 + $0x8] sm:$0xff] %vm159, %v209
    // Predicated region
    $region34: #{tpu_custom_call.1} parent=1 // pred_check
      _
    $region35: #{tpu_custom_call.1} parent=1 // pred_check_branch
      %261 = sbr.rel (0) target = $region37
    $region36: #{tpu_custom_call.1} parent=1 // pred_region
      %263 = vsyncadd [#allocation4], 0
      %s264 = sshll.u32 [#allocation10], 4
      %s265 = int_to_ptr.vmem [resolvable:$true] %s264
      %s266 = sshll.u32 %s4, 4
      %s267 = int_to_ptr.hbm [resolvable:$true] %s266
      %272 = dma.vmem_to_hbm [thread:$0]  %s265, 256, %s267, [#allocation4], 128, 128, 8
    $region37: #{tpu_custom_call.1} parent=1 // pred_fallthru
      _
    // Predicated region
    $region38: #{tpu_custom_call.1} parent=1 // pred_check
      _
    $region39: #{tpu_custom_call.1} parent=1 // pred_check_branch
      %274 = sbr.rel (0) target = $region41
    $region40: #{tpu_custom_call.1} parent=1 // pred_region
      %276 = vsyncadd [#allocation12], 0
      %s277 = sshll.u32 [#allocation11], 4
      %s278 = int_to_ptr.vmem [resolvable:$true] %s277
      %s279 = sshll.u32 %s5, 4
      %s280 = int_to_ptr.hbm [resolvable:$true] %s279
      %285 = dma.vmem_to_hbm [thread:$0]  %s278, 256, %s280, [#allocation12], 128, 128, 8
    $region41: #{tpu_custom_call.1} parent=1 // pred_fallthru
      _
    // Predicated region
    $region42: #{tpu_custom_call.1} parent=1 // pred_check
      _
    $region43: #{tpu_custom_call.1} parent=1 // pred_check_branch
      %287 = sbr.rel (0) target = $region45
    $region44: #{tpu_custom_call.1} parent=1 // pred_region
      %289 = dma.done [#allocation4], 256
    $region45: #{tpu_custom_call.1} parent=1 // pred_fallthru
      _
    // Predicated region
    $region46: #{tpu_custom_call.1} parent=1 // pred_check
      _
    $region47: #{tpu_custom_call.1} parent=1 // pred_check_branch
      %291 = sbr.rel (0) target = $region49
    $region48: #{tpu_custom_call.1} parent=1 // pred_region
      %293 = dma.done [#allocation12], 256
    $region49: #{tpu_custom_call.1} parent=1 // pred_fallthru
      _
    %294 = vsyncpa [#allocation3], 1
    %295 = vsyncpa [#allocation6], 1
    %296 = vsyncpa [#allocation9], 1
    %297 = vsyncpa [#allocation4], 1
    %298 = vsyncpa [#allocation12], 1

</llo_original>
